<compile_context>
chip_gen: v7x
topology: tpu7x:2x2x1
jax: 0.10.0
libtpu: 0.0.40
codegen_flags: <defaults>
</compile_context>

<pallas_src>
import functools
import math

import numpy as np
import jax
import jax.numpy as jnp
from jax.experimental import pallas as pl
from jax.experimental.pallas import tpu as pltpu


_MIN_GRID_STEPS = 8          # keep the DMA pipeline / both v7x cores busy


def _round_down(x, m):
    return (x // m) * m


def _round_up(x, m):
    return ((x + m - 1) // m) * m


def _chip_kind():
    try:
        return jax.devices()[0].device_kind.lower()
    except Exception:
        return ""


def _block_budget():
    """(per-array target block bytes, vmem_limit_bytes) for this chip family."""
    kind = _chip_kind()
    if ("v5" in kind) or ("v6" in kind):
        return 8 << 20, 96 << 20          # 128 MiB VMEM per TensorCore
    if ("v7" in kind) or ("7x" in kind):
        return 4 << 20, 48 << 20          # 64 MiB VMEM per TensorCore
    return 2 << 20, 24 << 20              # unknown / older: stay conservative


def _has_native_bf16_alu():
    """v6e and newer have bf16 VPU/EUP; v2-v5 do not (upcast there)."""
    kind = _chip_kind()
    if not kind:
        return False
    return not any(v in kind for v in ("v2", "v3", "v4", "v5"))


def _grad_flat_kernel(x_ref, o_ref, *, l1, w, compute_dtype):
    """Block = (TN, H*W): TN flattened images, each image's pixels along lanes."""
    x = x_ref[...].astype(compute_dtype)                      # (TN, L)
    lsz = x.shape[-1]
    lane = jax.lax.broadcasted_iota(jnp.int32, (1, lsz), 1)   # narrow mask iota
    if (w & (w - 1)) == 0:                                    # power-of-two W
        col_in_row = lane & (w - 1)
    else:
        col_in_row = lane % w
    first_col = col_in_row == 0      # j == 0 -> left neighbour is the zero pad
    first_row = lane < w             # i == 0 -> upper neighbour is the zero pad

    left = jnp.where(first_col, 0.0, pltpu.roll(x, shift=1, axis=1))
    up = jnp.where(first_row, 0.0, pltpu.roll(x, shift=w % lsz, axis=1))
    dx = left - x
    dy = up - x
    if l1:
        out = jnp.abs(dx) + jnp.abs(dy)
    else:
        out = jnp.sqrt(dx * dx + dy * dy)
    o_ref[...] = out.astype(o_ref.dtype)


def _grad_chunk_kernel(x_ref, o_ref, carry_ref, *, l1, compute_dtype):
    """Large-image path: (1, TH, W) row chunks of one image per grid step.

    The last row of each chunk is carried across grid steps in `carry_ref`
    (the h grid axis is sequential/"arbitrary"), so dy at a chunk boundary
    reads the true upper neighbour without re-DMAing the previous chunk.
    Compute stays in f32 here (sublane roll on packed bf16 is layout-fragile).
    """
    h = pl.program_id(1)

    @pl.when(h == 0)
    def _():
        carry_ref[...] = jnp.zeros_like(carry_ref)            # top-row zero pad

    x = x_ref[...].astype(compute_dtype)                      # (1, TH, W)
    th, w = x.shape[1], x.shape[2]
    row = jax.lax.broadcasted_iota(jnp.int32, (1, th, 1), 1)
    col = jax.lax.broadcasted_iota(jnp.int32, (1, 1, w), 2)

    left = jnp.where(col == 0, 0.0, pltpu.roll(x, shift=1, axis=2))
    up_roll = pltpu.roll(x, shift=1, axis=1)                  # row i <- row i-1
    head = carry_ref[...].reshape(1, 1, w)                    # prev chunk's last row
    up = jnp.where(row == 0, head, up_roll)
    dx = left - x
    dy = up - x
    if l1:
        out = jnp.abs(dx) + jnp.abs(dy)
    else:
        out = jnp.sqrt(dx * dx + dy * dy)
    o_ref[...] = out.astype(o_ref.dtype)
    carry_ref[...] = x[:, th - 1, :]                          # halo for next chunk


def tensor_gradient(img, L1=True, *, _target_block_bytes=None):
    """Pallas implementation of TensorGradient.forward for (..., H, W) inputs."""
    orig_shape = img.shape
    H, W = int(orig_shape[-2]), int(orig_shape[-1])
    L = H * W
    N = int(math.prod(orig_shape[:-2])) if len(orig_shape) > 2 else 1
    in_dtype = jnp.dtype(img.dtype)
    itemsize = in_dtype.itemsize
    pack = {4: 8, 2: 16, 1: 32}.get(itemsize, 8)   # sublane packing per dtype

    # bf16 L1 stays in bf16 on chips with bf16 VALUs; everything else uses f32
    # (L2 keeps f32 for square/sqrt; v5-class has no bf16 VPU/EUP).
    if L1 and in_dtype == jnp.dtype(jnp.bfloat16) and _has_native_bf16_alu():
        compute_dtype = jnp.bfloat16
    else:
        compute_dtype = jnp.float32

    target_bytes, vmem_limit = _block_budget()
    if _target_block_bytes is not None:            # test hook: force small blocks
        target_bytes = int(_target_block_bytes)
    live_itemsize = max(itemsize, jnp.dtype(compute_dtype).itemsize)
    block_elems = max(target_bytes // live_itemsize, 1)

    cost = pl.CostEstimate(
        flops=5 * N * L,
        transcendentals=0 if L1 else N * L,
        bytes_accessed=2 * N * L * itemsize,
    )

    rows_per_block = block_elems // L
    whole_fits = N * L <= block_elems

    if whole_fits or rows_per_block >= pack:
        # Lane-dense fast path: flatten each image into the lane dim, batch TN
        # images per block (TN a multiple of the sublane packing, or the full N).
        if N <= pack:
            tn = N
        else:
            # Cap TN so the grid keeps >= _MIN_GRID_STEPS steps when N allows it.
            cap = max(pack, _round_up(pl.cdiv(N, _MIN_GRID_STEPS), pack))
            tn = max(pack, min(_round_down(max(rows_per_block, pack), pack), cap))
        x = img.reshape((N, L))
        kernel = functools.partial(_grad_flat_kernel, l1=L1, w=W,
                                   compute_dtype=compute_dtype)
        out = pl.pallas_call(
            kernel,
            out_shape=jax.ShapeDtypeStruct((N, L), img.dtype),
            grid=(pl.cdiv(N, tn),),
            in_specs=[pl.BlockSpec((tn, L), lambda i: (i, 0))],
            out_specs=pl.BlockSpec((tn, L), lambda i: (i, 0)),
            compiler_params=pltpu.CompilerParams(
                dimension_semantics=("parallel",),
                vmem_limit_bytes=vmem_limit),
            cost_estimate=cost,
        )(x)
        return out.reshape(orig_shape)

    # Row-chunked path for large images: tile H into pack-aligned TH-row chunks;
    # the dy halo row is carried across the sequential h axis in VMEM scratch.
    # TODO(synk): a single row wider than the block budget (pack*W*4 bytes >
    # vmem_limit) would additionally need W-tiling with a 1-column halo.
    th = max(block_elems // W, 1)
    min_chunks = pl.cdiv(_MIN_GRID_STEPS, N)       # chunks/image to keep >=8 steps
    if min_chunks > 1:
        th = min(th, max(1, pl.cdiv(H, min_chunks)))
    if th >= H or H <= pack:
        th = H
    else:
        th = max(pack, _round_down(th, pack))
    hc = pl.cdiv(H, th)

    x = img.reshape((N, H, W))
    kernel = functools.partial(_grad_chunk_kernel, l1=L1,
                               compute_dtype=jnp.float32)
    out = pl.pallas_call(
        kernel,
        out_shape=jax.ShapeDtypeStruct((N, H, W), img.dtype),
        grid=(N, hc),
        in_specs=[pl.BlockSpec((1, th, W), lambda n, h: (n, h, 0))],
        out_specs=pl.BlockSpec((1, th, W), lambda n, h: (n, h, 0)),
        scratch_shapes=[pltpu.VMEM((1, W), jnp.float32)],
        compiler_params=pltpu.CompilerParams(
            dimension_semantics=("parallel", "arbitrary"),
            vmem_limit_bytes=vmem_limit),
        cost_estimate=cost,
    )(x)
    return out.reshape(orig_shape)


def _tensor_gradient_ref(img, L1=True):
    """Pure-JAX reference mirroring the PyTorch F.pad logic."""
    rows, cols = img.shape[-2], img.shape[-1]
    pad0 = [(0, 0)] * (img.ndim - 2)
    l = jnp.pad(img, pad0 + [(0, 0), (1, 0)])
    r = jnp.pad(img, pad0 + [(0, 0), (0, 1)])
    u = jnp.pad(img, pad0 + [(1, 0), (0, 0)])
    d = jnp.pad(img, pad0 + [(0, 1), (0, 0)])
    if L1:
        return (jnp.abs((l - r)[..., :rows, :cols])
                + jnp.abs((u - d)[..., :rows, :cols]))
    return jnp.sqrt(jnp.square((l - r)[..., :rows, :cols])
                    + jnp.square((u - d)[..., :rows, :cols]))


if __name__ == "__main__":
    key = jax.random.PRNGKey(0)
    x = jax.random.normal(key, (2, 4, 16, 16), dtype=jnp.float32)

    # L1 variant (module default), f32.
    out_l1 = jax.block_until_ready(tensor_gradient(x, L1=True))
    np.testing.assert_allclose(np.asarray(out_l1),
                               np.asarray(_tensor_gradient_ref(x, True)),
                               rtol=1e-5, atol=1e-5)

    # L2 variant.
    out_l2 = jax.block_until_ready(tensor_gradient(x, L1=False))
    np.testing.assert_allclose(np.asarray(out_l2),
                               np.asarray(_tensor_gradient_ref(x, False)),
                               rtol=1e-5, atol=1e-5)

    # Non-square spatial dims, 3-D input, multi-step fast-path grid with a
    # partial last block (N=10, tn=8).
    x2 = jax.random.normal(jax.random.PRNGKey(1), (10, 8, 32), dtype=jnp.float32)
    out2 = jax.block_until_ready(tensor_gradient(x2, L1=True))
    np.testing.assert_allclose(np.asarray(out2),
                               np.asarray(_tensor_gradient_ref(x2, True)),
                               rtol=1e-5, atol=1e-5)

    # bf16 input: L1 runs natively in bf16 on v6e+/v7x (f32 on v5-class chips).
    xb = x.astype(jnp.bfloat16)
    outb = jax.block_until_ready(tensor_gradient(xb, L1=True))
    np.testing.assert_allclose(np.asarray(outb.astype(jnp.float32)),
                               np.asarray(_tensor_gradient_ref(
                                   xb.astype(jnp.float32), True)),
                               rtol=5e-2, atol=5e-2)

    # Row-chunked large-image path (forced via a tiny block budget): carries the
    # dy halo row across chunks and handles a partial last chunk (H=37, TH=8).
    x3 = jax.random.normal(jax.random.PRNGKey(2), (3, 37, 128), dtype=jnp.float32)
    out3 = jax.block_until_ready(
        tensor_gradient(x3, L1=True, _target_block_bytes=16 << 10))
    np.testing.assert_allclose(np.asarray(out3),
                               np.asarray(_tensor_gradient_ref(x3, True)),
                               rtol=1e-5, atol=1e-5)

    # Chunked path with W not a multiple of 128 and the L2 variant.
    x4 = jax.random.normal(jax.random.PRNGKey(3), (2, 20, 48), dtype=jnp.float32)
    out4 = jax.block_until_ready(
        tensor_gradient(x4, L1=False, _target_block_bytes=16 << 10))
    np.testing.assert_allclose(np.asarray(out4),
                               np.asarray(_tensor_gradient_ref(x4, False)),
                               rtol=1e-5, atol=1e-5)

    print("KERNEL_OK")
</pallas_src>

<mosaic_0001>
module attributes {stable_mosaic.version = 11 : i64} {
  func.func @_grad_flat_kernel(%arg0: i32, %arg1: memref<8x256xf32, #tpu.memory_space<vmem>>, %arg2: memref<8x256xf32, #tpu.memory_space<vmem>>) attributes {dimension_semantics = [#tpu.dimension_semantics<parallel>], iteration_bounds = array<i64: 1>, scalar_prefetch = 0 : i64, scratch_operands = 0 : i64, tpu.core_type = #tpu.core_type<tc>, window_params = [{transform_indices = @transform_0, window_bounds = array<i64: 8, 256>}, {transform_indices = @transform_1, window_bounds = array<i64: 8, 256>}]} {
    %c0 = arith.constant 0 : index
    %c0_0 = arith.constant 0 : index
    %0 = vector.load %arg1[%c0, %c0_0] : memref<8x256xf32, #tpu.memory_space<vmem>>, vector<8x256xf32>
    %1 = tpu.iota {dimensions = array<i32: 1>} : vector<1x256xi32>
    %c15_i32 = arith.constant 15 : i32
    %2 = vector.broadcast %c15_i32 : i32 to vector<1x256xi32>
    %3 = arith.andi %1, %2 : vector<1x256xi32>
    %c0_i32 = arith.constant 0 : i32
    %4 = vector.broadcast %c0_i32 : i32 to vector<1x256xi32>
    %5 = arith.cmpi eq, %3, %4 : vector<1x256xi32>
    %c16_i32 = arith.constant 16 : i32
    %6 = vector.broadcast %c16_i32 : i32 to vector<1x256xi32>
    %7 = arith.cmpi slt, %1, %6 : vector<1x256xi32>
    %c1_i32 = arith.constant 1 : i32
    %8 = tpu.dynamic_rotate %0 by %c1_i32 dim 1 : vector<8x256xf32>, i32 -> vector<8x256xf32>
    %cst = arith.constant 0.000000e+00 : f32
    %9 = vector.shape_cast %5 : vector<1x256xi1> to vector<1x256xi1>
    %10 = vector.broadcast %9 : vector<1x256xi1> to vector<8x256xi1>
    %11 = vector.broadcast %cst : f32 to vector<8x256xf32>
    %12 = arith.select %10, %11, %8 : vector<8x256xi1>, vector<8x256xf32>
    %c16_i32_1 = arith.constant 16 : i32
    %13 = tpu.dynamic_rotate %0 by %c16_i32_1 dim 1 : vector<8x256xf32>, i32 -> vector<8x256xf32>
    %cst_2 = arith.constant 0.000000e+00 : f32
    %14 = vector.shape_cast %7 : vector<1x256xi1> to vector<1x256xi1>
    %15 = vector.broadcast %14 : vector<1x256xi1> to vector<8x256xi1>
    %16 = vector.broadcast %cst_2 : f32 to vector<8x256xf32>
    %17 = arith.select %15, %16, %13 : vector<8x256xi1>, vector<8x256xf32>
    %18 = arith.subf %12, %0 : vector<8x256xf32>
    %19 = arith.subf %17, %0 : vector<8x256xf32>
    %20 = math.absf %18 : vector<8x256xf32>
    %21 = math.absf %19 : vector<8x256xf32>
    %22 = arith.addf %20, %21 : vector<8x256xf32>
    %c0_3 = arith.constant 0 : index
    %c0_4 = arith.constant 0 : index
    %23 = vector.load %arg2[%c0_3, %c0_4] : memref<8x256xf32, #tpu.memory_space<vmem>>, vector<8x256xf32>
    tpu.vector_store %arg2[%c0_3, %c0_4], %22 {strides = array<i32>} : memref<8x256xf32, #tpu.memory_space<vmem>>, vector<8x256xf32>,
    return
  }
  func.func @transform_0(%arg0: i32) -> (i32, i32) {
    %c0_i32 = arith.constant 0 : i32
    %c0_i32_0 = arith.constant 0 : i32
    return %arg0, %c0_i32 : i32, i32
  }
  func.func @transform_1(%arg0: i32) -> (i32, i32) {
    %c0_i32 = arith.constant 0 : i32
    %c0_i32_0 = arith.constant 0 : i32
    return %arg0, %c0_i32 : i32, i32
  }
}

</mosaic_0001>

<llo_original>
// kernel: tpu_custom_call.1
$region0: #{tpu_custom_call.1}
  #allocation0 [shape = 'u32[]', space=smem, size = 0x4, offset = 0x4, fixed_abs, tag = 'smem constant byte address 0x4 - core index']
  #allocation1 [shape = 'u32[144,128]{1,0:T(1,128)}', space=vmem, size = 0x12000, scoped, tag = 'internal scratch']
  %s0 = inlined_call_operand.hbm [shape: f32[8,256], index: 0, kind: input, shape index: {}]
  %s1 = inlined_call_operand.hbm [shape: f32[8,256], index: 1, kind: output, shape index: {}]
  %s2 = sld [smem:[#allocation0]]
  $region18: #{tpu_custom_call.1} parent=0
    _
  %s4 = ssub.s32 1, %s2
  %s5 = scalar_select 0, %s4, %s2
  $region1: #{tpu_custom_call.1} parent=0
    #allocation2 [shape = 'u8[8192]{0}', space=vmem, size = 0x2000, scoped, tag = 'input window, operand 0, single buffered']
    #allocation3 [shape = 's32[1]{0}', space=sflag, size = 0x4, scoped, tag = 'scoped memory for tpu_custom_call.1']
    #allocation4 [shape = 's32[1]{0}', space=sflag, size = 0x4, scoped, tag = 'scoped memory for tpu_custom_call.1']
    #allocation5 [shape = 'u8[8192]{0}', space=vmem, size = 0x2000, scoped, tag = 'output window, operand 0, single buffered']
    %6 = vsyncpa [#allocation3], 0
    %7 = vsyncpa [#allocation4], 0
    // Predicated region
    $region2: #{tpu_custom_call.1} parent=1 // pred_check
      _
    $region3: #{tpu_custom_call.1} parent=1 // pred_check_branch
      %9 = sbr.rel (0) target = $region5
    $region4: #{tpu_custom_call.1} parent=1 // pred_region
      %s11 = ssub.s32 256, 256
      %12 = vsyncadd [#allocation3], %s11
      %s14 = sshll.u32 [#allocation2], 4
      %s15 = int_to_ptr.vmem [resolvable:$true] %s14
      %17 = dma.hbm_to_vmem [thread:$0]  %s0, 256, %s15, [#allocation3]
    $region5: #{tpu_custom_call.1} parent=1 // pred_fallthru
      _
    // Predicated region
    $region6: #{tpu_custom_call.1} parent=1 // pred_check
      _
    $region7: #{tpu_custom_call.1} parent=1 // pred_check_branch
      %19 = sbr.rel (0) target = $region9
    $region8: #{tpu_custom_call.1} parent=1 // pred_region
      %20 = dma.done [#allocation3], 256
    $region9: #{tpu_custom_call.1} parent=1 // pred_fallthru
      _
    %v21 = vld [vmem:[#allocation2] sm:$0xff]
    %v22 = vld [vmem:[#allocation2 + $0x8] sm:$0xff]
    %v23 = vlaneseq
    %v24 = vand.u32 %v23, 127
    %v25 = vadd.s32 %v24, 128
    %v26 = vand.u32 %v24, 15
    %v27 = vand.u32 %v25, 15
    %vm28 = vcmp.eq.s32.totalorder %v26, 0
    %vm29 = vcmp.eq.s32.totalorder %v27, 0
    %vm30 = vcmp.lt.s32.totalorder %v24, 16
    %vm31 = vcmp.lt.s32.totalorder %v25, 16
    %32 = vrot.lane.b32.xlu0 %v21, 1
    %v33 = vpop.permute.xlu0 %32
    %34 = vrot.lane.b32.xlu0 %v22, 1
    %v35 = vpop.permute.xlu0 %34
    %vm36 = vcmp.lt.s32.totalorder %v24, 1
    %v37 = vsel %vm36, %v33, %v35
    %v38 = vsel %vm36, %v35, %v33
    %v39 = vsel %vm28, 1, 0
    %v40 = vsel %vm29, 1, 0
    %vm41 = vcmp.eq.s32.totalorder %v39, 1
    %vm42 = vcmp.eq.s32.totalorder %v40, 1
    %v43 = vsel %vm41, 0.0, %v38
    %v44 = vsel %vm42, 0.0, %v37
    %45 = vrot.lane.b32.xlu0 %v21, 16
    %v46 = vpop.permute.xlu0 %45
    %47 = vrot.lane.b32.xlu0 %v22, 16
    %v48 = vpop.permute.xlu0 %47
    %v49 = vsel %vm30, %v46, %v48
    %v50 = vsel %vm30, %v48, %v46
    %v51 = vsel %vm30, 1, 0
    %v52 = vsel %vm31, 1, 0
    %vm53 = vcmp.eq.s32.totalorder %v51, 1
    %vm54 = vcmp.eq.s32.totalorder %v52, 1
    %v55 = vsel %vm53, 0.0, %v50
    %v56 = vsel %vm54, 0.0, %v49
    %v57 = vsub.f32 %v43, %v21
    %v58 = vsub.f32 %v44, %v22
    %v59 = vsub.f32 %v55, %v21
    %v60 = vsub.f32 %v56, %v22
    %v61 = vand.u32 2147483647, %v57
    %v62 = vand.u32 2147483647, %v58
    %v63 = vand.u32 2147483647, %v59
    %v64 = vand.u32 2147483647, %v60
    %v65 = vadd.f32 %v61, %v63
    %v66 = vadd.f32 %v62, %v64
    %67 = vst [vmem:[#allocation5] sm:$0xff] %v65
    %68 = vst [vmem:[#allocation5 + $0x8] sm:$0xff] %v66
    // Predicated region
    $region10: #{tpu_custom_call.1} parent=1 // pred_check
      _
    $region11: #{tpu_custom_call.1} parent=1 // pred_check_branch
      %70 = sbr.rel (0) target = $region13
    $region12: #{tpu_custom_call.1} parent=1 // pred_region
      %s72 = ssub.s32 256, 256
      %73 = vsyncadd [#allocation4], %s72
      %s75 = sshll.u32 [#allocation5], 4
      %s76 = int_to_ptr.vmem [resolvable:$true] %s75
      %78 = dma.vmem_to_hbm [thread:$0]  %s76, 256, %s1, [#allocation4]
    $region13: #{tpu_custom_call.1} parent=1 // pred_fallthru
      _
    // Predicated region
    $region14: #{tpu_custom_call.1} parent=1 // pred_check
      _
    $region15: #{tpu_custom_call.1} parent=1 // pred_check_branch
      %80 = sbr.rel (0) target = $region17
    $region16: #{tpu_custom_call.1} parent=1 // pred_region
      %81 = dma.done [#allocation4], 256
    $region17: #{tpu_custom_call.1} parent=1 // pred_fallthru
      _
    %82 = vsyncpa [#allocation3], 1
    %83 = vsyncpa [#allocation4], 1

</llo_original>
